<compile_context>
chip_gen: v7x
topology: tpu7x:2x2x1
jax: 0.10.0
libtpu: 0.0.40
codegen_flags: <defaults>
</compile_context>

<pallas_src>
import jax
import jax.numpy as jnp
from jax.experimental import pallas as pl
from jax.experimental.pallas import tpu as pltpu

_LANE = 128


# ---------------------------------------------------------------------------
# Kernels
# ---------------------------------------------------------------------------

def _outconv_vpu_kernel(x_ref, w_ref, b_ref, o_ref):
    """Small-channel path: fully unrolled VPU multiply-adds.

    x_ref: (cin, T)   VMEM  input tile (spatial in lanes)
    w_ref: (cout,cin) SMEM  weights (scalar reads)
    b_ref: (cout,)    SMEM  bias    (scalar reads)
    o_ref: (cout, T)  VMEM  output tile (lane-dense)
    """
    cin, t = x_ref.shape
    cout = o_ref.shape[0]
    x = x_ref[...].astype(jnp.float32)             # (cin, T)
    rows = []
    for co in range(cout):                         # static unroll (tiny cout)
        acc = jnp.full((1, t), b_ref[co], dtype=jnp.float32)
        for ci in range(cin):                      # static unroll (tiny cin)
            acc = acc + w_ref[co, ci] * x[ci:ci + 1, :]
        rows.append(acc)
    o_ref[...] = jnp.concatenate(rows, axis=0).astype(o_ref.dtype)


def _outconv_mxu_kernel(x_ref, w_ref, b_ref, o_ref):
    """General path: MXU matmul, weights resident in VMEM.

    x_ref: (cin, T), w_ref: (cout, cin), b_ref: (cout, 1), o_ref: (cout, T).
    """
    acc = jnp.dot(w_ref[...], x_ref[...], preferred_element_type=jnp.float32)
    o_ref[...] = (acc + b_ref[...].astype(jnp.float32)).astype(o_ref.dtype)


# ---------------------------------------------------------------------------
# Wrapper
# ---------------------------------------------------------------------------

def _round_up(x, m):
    return -(-x // m) * m


def _pick_spatial_tile(hw, cin, cout, itemsize, max_tile_bytes=4 << 20):
    """Largest lane-multiple tile whose double-buffered in+out fits the budget."""
    per_col = 2 * (cin + cout) * itemsize          # in + out, double-buffered
    cap = max(_LANE, (max_tile_bytes // per_col) // _LANE * _LANE)
    cap = min(cap, 4096)                           # conservative for v7x VMEM
    return min(cap, _round_up(hw, _LANE))


def out_conv_forward(x_nchw, weight, bias):
    """Equivalent of nn.Conv2d(in_channels, out_channels, kernel_size=1)(x).

    x_nchw: (N, C_in, H, W); weight: (C_out, C_in, 1, 1); bias: (C_out,)
    returns (N, C_out, H, W), same dtype as x.
    """
    N, cin, H, W = x_nchw.shape
    cout = weight.shape[0]
    hw = H * W
    itemsize = jnp.dtype(x_nchw.dtype).itemsize

    t = _pick_spatial_tile(hw, cin, cout, itemsize)
    hw_pad = _round_up(hw, t)

    # Free reshape: NCHW -> (N, C, HW); pad only the flattened spatial axis.
    x3d = x_nchw.reshape(N, cin, hw)
    if hw_pad != hw:
        x3d = jnp.pad(x3d, ((0, 0), (0, 0), (0, hw_pad - hw)))

    w2d = weight.reshape(cout, cin)
    grid = (N, hw_pad // t)

    x_spec = pl.BlockSpec((None, cin, t), lambda n, s: (n, 0, s))
    o_spec = pl.BlockSpec((None, cout, t), lambda n, s: (n, 0, s))

    small = (cin * cout) <= 256                    # fully-unrollable contraction
    if small:
        kernel = _outconv_vpu_kernel
        w_arg, b_arg = w2d, bias
        w_spec = pl.BlockSpec(memory_space=pltpu.MemorySpace.SMEM)
        b_spec = pl.BlockSpec(memory_space=pltpu.MemorySpace.SMEM)
    else:
        kernel = _outconv_mxu_kernel
        w_arg, b_arg = w2d, bias.reshape(cout, 1)
        w_spec = pl.BlockSpec((cout, cin), lambda n, s: (0, 0))
        b_spec = pl.BlockSpec((cout, 1), lambda n, s: (0, 0))

    tile_bytes = 2 * (cin + cout) * t * itemsize   # double-buffered in+out tiles
    vmem_limit = int(min(100 << 20, max(4 * tile_bytes + (2 << 20), 16 << 20)))

    cost = pl.CostEstimate(
        flops=2 * N * hw * cin * cout,
        transcendentals=0,
        bytes_accessed=itemsize * (N * cin * hw + N * cout * hw)
        + 4 * (cin * cout + cout),
    )

    y3d = pl.pallas_call(
        kernel,
        out_shape=jax.ShapeDtypeStruct((N, cout, hw_pad), x_nchw.dtype),
        grid=grid,
        in_specs=[x_spec, w_spec, b_spec],
        out_specs=o_spec,
        compiler_params=pltpu.CompilerParams(
            dimension_semantics=("parallel", "parallel"),
            vmem_limit_bytes=vmem_limit,
        ),
        cost_estimate=cost,
    )(x3d, w_arg, b_arg)

    if hw_pad != hw:
        y3d = y3d[:, :, :hw]
    return y3d.reshape(N, cout, H, W)


if __name__ == "__main__":
    key = jax.random.PRNGKey(0)
    k_x, k_w, k_b = jax.random.split(key, 3)

    N, cin, H, W = 2, 4, 16, 16
    cout = 3

    x = jax.random.normal(k_x, (N, cin, H, W), dtype=jnp.float32)

    # Deterministic parameter init (mimics Conv2d kaiming-uniform bounds).
    fan_in = cin * 1 * 1
    bound = 1.0 / (fan_in ** 0.5)
    weight = jax.random.uniform(k_w, (cout, cin, 1, 1), jnp.float32, -bound, bound)
    bias = jax.random.uniform(k_b, (cout,), jnp.float32, -bound, bound)

    fwd = jax.jit(out_conv_forward)
    y = jax.block_until_ready(fwd(x, weight, bias))

    # Reference check in plain JAX (1x1 conv == einsum over channels + bias).
    y_ref = jnp.einsum("nchw,oc->nohw", x, weight.reshape(cout, cin)) \
        + bias.reshape(1, cout, 1, 1)
    assert y.shape == (N, cout, H, W)
    assert jnp.allclose(y, y_ref, atol=1e-5, rtol=1e-5)

    print("KERNEL_OK")
</pallas_src>

<mosaic_0001>
module attributes {stable_mosaic.version = 11 : i64} {
  func.func @_outconv_vpu_kernel(%arg0: i32, %arg1: i32, %arg2: memref<1x4x256xf32, #tpu.memory_space<vmem>>, %arg3: memref<3x4xf32, #tpu.memory_space<smem>>, %arg4: memref<3xf32, #tpu.memory_space<smem>>, %arg5: memref<1x3x256xf32, #tpu.memory_space<vmem>>) attributes {dimension_semantics = [#tpu.dimension_semantics<parallel>, #tpu.dimension_semantics<parallel>], iteration_bounds = array<i64: 2, 1>, scalar_prefetch = 0 : i64, scratch_operands = 0 : i64, tpu.core_type = #tpu.core_type<tc>, window_params = [{transform_indices = @transform_0, window_bounds = array<i64: 1, 4, 256>}, {transform_indices = @transform_1, window_bounds = array<i64: 3, 4>}, {transform_indices = @transform_2, window_bounds = array<i64: 3>}, {transform_indices = @transform_3, window_bounds = array<i64: 1, 3, 256>}]} {
    %c0 = arith.constant 0 : index
    %c0_0 = arith.constant 0 : index
    %c0_1 = arith.constant 0 : index
    %0 = vector.load %arg2[%c0, %c0_0, %c0_1] : memref<1x4x256xf32, #tpu.memory_space<vmem>>, vector<1x4x256xf32>
    %1 = vector.shape_cast %0 : vector<1x4x256xf32> to vector<4x256xf32>
    %c0_2 = arith.constant 0 : index
    %2 = memref.load %arg4[%c0_2] : memref<3xf32, #tpu.memory_space<smem>>
    %3 = vector.broadcast %2 : f32 to vector<1x256xf32>
    %c0_3 = arith.constant 0 : index
    %c0_4 = arith.constant 0 : index
    %4 = memref.load %arg3[%c0_3, %c0_4] : memref<3x4xf32, #tpu.memory_space<smem>>
    %5 = vector.extract_strided_slice %1 {offsets = [0, 0], sizes = [1, 256], strides = [1, 1]} : vector<4x256xf32> to vector<1x256xf32>
    %6 = vector.broadcast %4 : f32 to vector<1x256xf32>
    %7 = arith.mulf %6, %5 : vector<1x256xf32>
    %8 = arith.addf %3, %7 : vector<1x256xf32>
    %c0_5 = arith.constant 0 : index
    %c1 = arith.constant 1 : index
    %9 = memref.load %arg3[%c0_5, %c1] : memref<3x4xf32, #tpu.memory_space<smem>>
    %10 = vector.extract_strided_slice %1 {offsets = [1, 0], sizes = [1, 256], strides = [1, 1]} : vector<4x256xf32> to vector<1x256xf32>
    %11 = vector.broadcast %9 : f32 to vector<1x256xf32>
    %12 = arith.mulf %11, %10 : vector<1x256xf32>
    %13 = arith.addf %8, %12 : vector<1x256xf32>
    %c0_6 = arith.constant 0 : index
    %c2 = arith.constant 2 : index
    %14 = memref.load %arg3[%c0_6, %c2] : memref<3x4xf32, #tpu.memory_space<smem>>
    %15 = vector.extract_strided_slice %1 {offsets = [2, 0], sizes = [1, 256], strides = [1, 1]} : vector<4x256xf32> to vector<1x256xf32>
    %16 = vector.broadcast %14 : f32 to vector<1x256xf32>
    %17 = arith.mulf %16, %15 : vector<1x256xf32>
    %18 = arith.addf %13, %17 : vector<1x256xf32>
    %c0_7 = arith.constant 0 : index
    %c3 = arith.constant 3 : index
    %19 = memref.load %arg3[%c0_7, %c3] : memref<3x4xf32, #tpu.memory_space<smem>>
    %20 = vector.extract_strided_slice %1 {offsets = [3, 0], sizes = [1, 256], strides = [1, 1]} : vector<4x256xf32> to vector<1x256xf32>
    %21 = vector.broadcast %19 : f32 to vector<1x256xf32>
    %22 = arith.mulf %21, %20 : vector<1x256xf32>
    %23 = arith.addf %18, %22 : vector<1x256xf32>
    %c1_8 = arith.constant 1 : index
    %24 = memref.load %arg4[%c1_8] : memref<3xf32, #tpu.memory_space<smem>>
    %25 = vector.broadcast %24 : f32 to vector<1x256xf32>
    %c1_9 = arith.constant 1 : index
    %c0_10 = arith.constant 0 : index
    %26 = memref.load %arg3[%c1_9, %c0_10] : memref<3x4xf32, #tpu.memory_space<smem>>
    %27 = vector.extract_strided_slice %1 {offsets = [0, 0], sizes = [1, 256], strides = [1, 1]} : vector<4x256xf32> to vector<1x256xf32>
    %28 = vector.broadcast %26 : f32 to vector<1x256xf32>
    %29 = arith.mulf %28, %27 : vector<1x256xf32>
    %30 = arith.addf %25, %29 : vector<1x256xf32>
    %c1_11 = arith.constant 1 : index
    %c1_12 = arith.constant 1 : index
    %31 = memref.load %arg3[%c1_11, %c1_12] : memref<3x4xf32, #tpu.memory_space<smem>>
    %32 = vector.extract_strided_slice %1 {offsets = [1, 0], sizes = [1, 256], strides = [1, 1]} : vector<4x256xf32> to vector<1x256xf32>
    %33 = vector.broadcast %31 : f32 to vector<1x256xf32>
    %34 = arith.mulf %33, %32 : vector<1x256xf32>
    %35 = arith.addf %30, %34 : vector<1x256xf32>
    %c1_13 = arith.constant 1 : index
    %c2_14 = arith.constant 2 : index
    %36 = memref.load %arg3[%c1_13, %c2_14] : memref<3x4xf32, #tpu.memory_space<smem>>
    %37 = vector.extract_strided_slice %1 {offsets = [2, 0], sizes = [1, 256], strides = [1, 1]} : vector<4x256xf32> to vector<1x256xf32>
    %38 = vector.broadcast %36 : f32 to vector<1x256xf32>
    %39 = arith.mulf %38, %37 : vector<1x256xf32>
    %40 = arith.addf %35, %39 : vector<1x256xf32>
    %c1_15 = arith.constant 1 : index
    %c3_16 = arith.constant 3 : index
    %41 = memref.load %arg3[%c1_15, %c3_16] : memref<3x4xf32, #tpu.memory_space<smem>>
    %42 = vector.extract_strided_slice %1 {offsets = [3, 0], sizes = [1, 256], strides = [1, 1]} : vector<4x256xf32> to vector<1x256xf32>
    %43 = vector.broadcast %41 : f32 to vector<1x256xf32>
    %44 = arith.mulf %43, %42 : vector<1x256xf32>
    %45 = arith.addf %40, %44 : vector<1x256xf32>
    %c2_17 = arith.constant 2 : index
    %46 = memref.load %arg4[%c2_17] : memref<3xf32, #tpu.memory_space<smem>>
    %47 = vector.broadcast %46 : f32 to vector<1x256xf32>
    %c2_18 = arith.constant 2 : index
    %c0_19 = arith.constant 0 : index
    %48 = memref.load %arg3[%c2_18, %c0_19] : memref<3x4xf32, #tpu.memory_space<smem>>
    %49 = vector.extract_strided_slice %1 {offsets = [0, 0], sizes = [1, 256], strides = [1, 1]} : vector<4x256xf32> to vector<1x256xf32>
    %50 = vector.broadcast %48 : f32 to vector<1x256xf32>
    %51 = arith.mulf %50, %49 : vector<1x256xf32>
    %52 = arith.addf %47, %51 : vector<1x256xf32>
    %c2_20 = arith.constant 2 : index
    %c1_21 = arith.constant 1 : index
    %53 = memref.load %arg3[%c2_20, %c1_21] : memref<3x4xf32, #tpu.memory_space<smem>>
    %54 = vector.extract_strided_slice %1 {offsets = [1, 0], sizes = [1, 256], strides = [1, 1]} : vector<4x256xf32> to vector<1x256xf32>
    %55 = vector.broadcast %53 : f32 to vector<1x256xf32>
    %56 = arith.mulf %55, %54 : vector<1x256xf32>
    %57 = arith.addf %52, %56 : vector<1x256xf32>
    %c2_22 = arith.constant 2 : index
    %c2_23 = arith.constant 2 : index
    %58 = memref.load %arg3[%c2_22, %c2_23] : memref<3x4xf32, #tpu.memory_space<smem>>
    %59 = vector.extract_strided_slice %1 {offsets = [2, 0], sizes = [1, 256], strides = [1, 1]} : vector<4x256xf32> to vector<1x256xf32>
    %60 = vector.broadcast %58 : f32 to vector<1x256xf32>
    %61 = arith.mulf %60, %59 : vector<1x256xf32>
    %62 = arith.addf %57, %61 : vector<1x256xf32>
    %c2_24 = arith.constant 2 : index
    %c3_25 = arith.constant 3 : index
    %63 = memref.load %arg3[%c2_24, %c3_25] : memref<3x4xf32, #tpu.memory_space<smem>>
    %64 = vector.extract_strided_slice %1 {offsets = [3, 0], sizes = [1, 256], strides = [1, 1]} : vector<4x256xf32> to vector<1x256xf32>
    %65 = vector.broadcast %63 : f32 to vector<1x256xf32>
    %66 = arith.mulf %65, %64 : vector<1x256xf32>
    %67 = arith.addf %62, %66 : vector<1x256xf32>
    %68 = tpu.concatenate %23, %45, %67 in 0 : vector<1x256xf32>, vector<1x256xf32>, vector<1x256xf32> -> vector<3x256xf32>
    %c0_26 = arith.constant 0 : index
    %c0_27 = arith.constant 0 : index
    %c0_28 = arith.constant 0 : index
    %69 = vector.load %arg5[%c0_26, %c0_27, %c0_28] : memref<1x3x256xf32, #tpu.memory_space<vmem>>, vector<1x3x256xf32>
    %70 = vector.shape_cast %69 : vector<1x3x256xf32> to vector<3x256xf32>
    %71 = vector.shape_cast %68 : vector<3x256xf32> to vector<1x3x256xf32>
    tpu.vector_store %arg5[%c0_26, %c0_27, %c0_28], %71 {strides = array<i32>} : memref<1x3x256xf32, #tpu.memory_space<vmem>>, vector<1x3x256xf32>,
    return
  }
  func.func @transform_0(%arg0: i32, %arg1: i32) -> (i32, i32, i32) {
    %c0_i32 = arith.constant 0 : i32
    %c0_i32_0 = arith.constant 0 : i32
    return %arg0, %c0_i32, %arg1 : i32, i32, i32
  }
  func.func @transform_1(%arg0: i32, %arg1: i32) -> (i32, i32) {
    %c0_i32 = arith.constant 0 : i32
    %c0_i32_0 = arith.constant 0 : i32
    %c0_i32_1 = arith.constant 0 : i32
    return %c0_i32, %c0_i32_0 : i32, i32
  }
  func.func @transform_2(%arg0: i32, %arg1: i32) -> i32 {
    %c0_i32 = arith.constant 0 : i32
    %c0_i32_0 = arith.constant 0 : i32
    return %c0_i32 : i32
  }
  func.func @transform_3(%arg0: i32, %arg1: i32) -> (i32, i32, i32) {
    %c0_i32 = arith.constant 0 : i32
    %c0_i32_0 = arith.constant 0 : i32
    return %arg0, %c0_i32, %arg1 : i32, i32, i32
  }
}

</mosaic_0001>

<llo_original>
// kernel: out_conv_forward.1
$region0: #{out_conv_forward.1}
  #allocation0 [shape = 'u32[]', space=smem, size = 0x4, offset = 0x4, fixed_abs, tag = 'smem constant byte address 0x4 - core index']
  #allocation1 [shape = 'u32[144,128]{1,0:T(1,128)}', space=vmem, size = 0x12000, scoped, tag = 'internal scratch']
  %s0 = inlined_call_operand.vmem [shape: f32[2,4,256], index: 0, kind: input, shape index: {}]
  %s1 = inlined_call_operand.vmem [shape: f32[3,4], index: 1, kind: input, shape index: {}]
  %s2 = inlined_call_operand.vmem [shape: f32[3], index: 2, kind: input, shape index: {}]
  %s3 = inlined_call_operand.vmem [shape: f32[2,3,256], index: 3, kind: output, shape index: {}]
  %s4 = sld [smem:[#allocation0]]
  $region53: #{out_conv_forward.1} parent=0
    _
  %s6 = ssub.s32 1, %s4
  %s7 = scalar_select 0, %s6, %s4
  $region1: #{out_conv_forward.1} parent=0
    #allocation2 [shape = 'u8[2048]{0}', space=smem, size = 0x800, scoped, tag = 'input window, operand 1, single buffered']
    #allocation3 [shape = 's32[2]{0}', space=sflag, size = 0x8, scoped, tag = 'scoped memory for out_conv_forward.1']
    #allocation4 [shape = 'u8[512]{0}', space=smem, size = 0x200, scoped, tag = 'input window, operand 2, single buffered']
    #allocation5 [shape = 's32[1]{0}', space=sflag, size = 0x4, scoped, tag = 'scoped memory for out_conv_forward.1']
    %8 = vsyncpa [#allocation3], 0
    %9 = vsyncpa [#allocation5], 0
    loop: start=0, step=1, limit=4
    $region2: #{out_conv_forward.1} parent=1 // loop_pre_header
      _
    $region3: #{out_conv_forward.1} parent=1 // loop_header
      %s11 = sphi 0, %s15
      %p12 = scmp.ge.s32.totalorder %s11, 4
      %s18 = sphi 0, %s30
      %s19 = sphi 0, %s26
      %s20 = sphi 0, %s18
      %s21 = sphi 0, %s19
      %s22 = sphi 0, %s20
      %s23 = sphi 0, %s21
      %s35 = sphi 0, %s37
      %s38 = sphi 0, %s35
      %s39 = sphi 0, %s38
      %s55 = sphi 0, %s39
      %s59 = sphi 0, %s59
      %s61 = sphi 0, %s59
      %s62 = sphi 0, %s61
      %s76 = sphi 0, %s62
      %s80 = sphi 0, %s80
      %s82 = sphi 0, %s80
      %s83 = sphi 0, %s82
      %s97 = sphi 0, %s83
      %s105 = sphi 0, %s107
      %s108 = sphi 0, %s105
      %s109 = sphi 0, %s108
      %s125 = sphi 0, %s109
    $region4: #{out_conv_forward.1} parent=1 // loop_header_branch
      %14 = sbr.rel (%p12) target = $region8
    $region5: #{out_conv_forward.1} parent=1 // loop_body
      %s16 = ssub.s32 %s11, 1
      %s17 = ssub.s32 %s11, 2
      %s24 = sadd.s32 1, %s19
      %p25 = scmp.ge.s32.totalorder %s24, 1
      %s26 = scalar_select %p25, 0, %s24
      %s27 = sadd.s32 1, %s18
      %s28 = scalar_select %p25, %s27, %s18
      %p29 = scmp.ge.s32.totalorder %s28, 2
      %s30 = scalar_select %p29, 0, %s28
      %s31 = ssub.s32 %s18, %s30
      %s32 = ssub.s32 %s19, %s26
      %s33 = sor.u32 %s31, %s32
      %p34 = scmp.eq.s32.totalorder %s33, 0
      %s36 = sadd.s32 %s35, 1
      %s37 = scalar_select %p34, %s35, %s36
      %p40 = pneg %p34
      %p41 = scmp.eq.s32.totalorder %s11, 1
      %p42 = por %p40, %p41
      %p43 = scmp.ne.s32.totalorder %s35, %s38
      %p44 = scmp.eq.s32.totalorder %s11, 0
      %p45 = por %p43, %p44
      %p46 = scmp.ne.s32.totalorder %s35, %s38
      %p47 = scmp.eq.s32.totalorder %s16, 1
      %p48 = por %p46, %p47
      %p49 = scmp.ne.s32.totalorder %s38, %s39
      %p50 = scmp.eq.s32.totalorder %s16, 0
      %p51 = por %p49, %p50
      %p52 = scmp.ne.s32.totalorder %s38, %s39
      %p53 = scmp.eq.s32.totalorder %s17, 1
      %p54 = por %p52, %p53
      %p56 = scmp.ne.s32.totalorder %s39, %s55
      %p57 = scmp.eq.s32.totalorder %s17, 0
      %p58 = por %p56, %p57
      %s60 = sadd.s32 %s59, 1
      %p63 = scmp.eq.s32.totalorder %s11, 1
      %p64 = scmp.ne.s32.totalorder %s59, %s61
      %p65 = scmp.eq.s32.totalorder %s11, 0
      %p66 = por %p64, %p65
      %p67 = scmp.ne.s32.totalorder %s59, %s61
      %p68 = scmp.eq.s32.totalorder %s16, 1
      %p69 = por %p67, %p68
      %p70 = scmp.ne.s32.totalorder %s61, %s62
      %p71 = scmp.eq.s32.totalorder %s16, 0
      %p72 = por %p70, %p71
      %p73 = scmp.ne.s32.totalorder %s61, %s62
      %p74 = scmp.eq.s32.totalorder %s17, 1
      %p75 = por %p73, %p74
      %p77 = scmp.ne.s32.totalorder %s62, %s76
      %p78 = scmp.eq.s32.totalorder %s17, 0
      %p79 = por %p77, %p78
      %s81 = sadd.s32 %s80, 1
      %p84 = scmp.eq.s32.totalorder %s11, 1
      %p85 = scmp.ne.s32.totalorder %s80, %s82
      %p86 = scmp.eq.s32.totalorder %s11, 0
      %p87 = por %p85, %p86
      %p88 = scmp.ne.s32.totalorder %s80, %s82
      %p89 = scmp.eq.s32.totalorder %s16, 1
      %p90 = por %p88, %p89
      %p91 = scmp.ne.s32.totalorder %s82, %s83
      %p92 = scmp.eq.s32.totalorder %s16, 0
      %p93 = por %p91, %p92
      %p94 = scmp.ne.s32.totalorder %s82, %s83
      %p95 = scmp.eq.s32.totalorder %s17, 1
      %p96 = por %p94, %p95
      %p98 = scmp.ne.s32.totalorder %s83, %s97
      %p99 = scmp.eq.s32.totalorder %s17, 0
      %p100 = por %p98, %p99
      %s101 = ssub.s32 %s18, %s30
      %s102 = ssub.s32 %s19, %s26
      %s103 = sor.u32 %s101, %s102
      %p104 = scmp.eq.s32.totalorder %s103, 0
      %s106 = sadd.s32 %s105, 1
      %s107 = scalar_select %p104, %s105, %s106
      %p110 = pneg %p104
      %p111 = scmp.eq.s32.totalorder %s11, 1
      %p112 = por %p110, %p111
      %p113 = scmp.ne.s32.totalorder %s105, %s108
      %p114 = scmp.eq.s32.totalorder %s11, 0
      %p115 = por %p113, %p114
      %p116 = scmp.ne.s32.totalorder %s105, %s108
      %p117 = scmp.eq.s32.totalorder %s16, 1
      %p118 = por %p116, %p117
      %p119 = scmp.ne.s32.totalorder %s108, %s109
      %p120 = scmp.eq.s32.totalorder %s16, 0
      %p121 = por %p119, %p120
      %p122 = scmp.ne.s32.totalorder %s108, %s109
      %p123 = scmp.eq.s32.totalorder %s17, 1
      %p124 = por %p122, %p123
      %p126 = scmp.ne.s32.totalorder %s109, %s125
      %p127 = scmp.eq.s32.totalorder %s17, 0
      %p128 = por %p126, %p127
      %p129 = scmp.le.s32.totalorder 1, %s11
      %p130 = scmp.lt.s32.totalorder %s11, 3
      %p131 = pnand %p129, %p130
      %p132 = pneg %p131
      // Predicated region
      $region9: #{out_conv_forward.1} parent=5 // pred_check
        _
      $region10: #{out_conv_forward.1} parent=5 // pred_check_branch
        %134 = sbr.rel (%p131) target = $region12
      $region11: #{out_conv_forward.1} parent=5 // pred_region
        %s135 = ssub.s32 %s11, 1
        // Predicated region
        $region13: #{out_conv_forward.1} parent=11 // pred_check
          %p136 = pneg %p72
        $region14: #{out_conv_forward.1} parent=11 // pred_check_branch
          %138 = sbr.rel (%p136) target = $region16
        $region15: #{out_conv_forward.1} parent=11 // pred_region
          %s140 = ssub.s32 64, 64
          %141 = vsyncadd [#allocation3], %s140
          %s143 = sshll.u32 %s1, 4
          %s144 = int_to_ptr.vmem [resolvable:$true] %s143
          %146 = dma.vmem_to_smem %s144, 64, [#allocation2], [#allocation3]
        $region16: #{out_conv_forward.1} parent=11 // pred_fallthru
          _
        // Predicated region
        $region17: #{out_conv_forward.1} parent=11 // pred_check
          %p147 = pneg %p93
        $region18: #{out_conv_forward.1} parent=11 // pred_check_branch
          %149 = sbr.rel (%p147) target = $region20
        $region19: #{out_conv_forward.1} parent=11 // pred_region
          %s151 = ssub.s32 16, 16
          %152 = vsyncadd [#allocation5], %s151
          %s154 = sshll.u32 %s2, 4
          %s155 = int_to_ptr.vmem [resolvable:$true] %s154
          %157 = dma.vmem_to_smem %s155, 16, [#allocation4], [#allocation5]
        $region20: #{out_conv_forward.1} parent=11 // pred_fallthru
          _
      $region12: #{out_conv_forward.1} parent=5 // pred_fallthru
        _
      %p158 = scmp.lt.s32.totalorder %s11, 2
      // Predicated region
      $region21: #{out_conv_forward.1} parent=5 // pred_check
        %p159 = pneg %p158
      $region22: #{out_conv_forward.1} parent=5 // pred_check_branch
        %161 = sbr.rel (%p159) target = $region24
      $region23: #{out_conv_forward.1} parent=5 // pred_region
        // Predicated region
        $region25: #{out_conv_forward.1} parent=23 // pred_check
          %p162 = pneg %p45
        $region26: #{out_conv_forward.1} parent=23 // pred_check_branch
          %164 = sbr.rel (%p162) target = $region28
        $region27: #{out_conv_forward.1} parent=23 // pred_region
          %s165 = smul.u32 2, %s19
          %p166 = scmp.lt.s32.totalorder %s18, 1
          %s167 = scalar_select %p166, %s18, 1
          %p168 = scmp.lt.s32.totalorder %s165, 1
          %s169 = scalar_select %p168, %s165, 1
          %s170 = smul.addr %s167, 2
          %s171 = sadd.s32 %s169, %s170
          %s172 = smul.addr %s171, 4
          %s173 = scalar_lea.vmem %s0, %s172
          %s174 = smul.u32 2, %s19
        $region28: #{out_conv_forward.1} parent=23 // pred_fallthru
          _
      $region24: #{out_conv_forward.1} parent=5 // pred_fallthru
        _
      %p175 = scmp.le.s32.totalorder 1, %s11
      %p176 = scmp.lt.s32.totalorder %s11, 3
      %p177 = pnand %p175, %p176
      %p178 = pneg %p177
      // Predicated region
      $region29: #{out_conv_forward.1} parent=5 // pred_check
        _
      $region30: #{out_conv_forward.1} parent=5 // pred_check_branch
        %180 = sbr.rel (%p177) target = $region32
      $region31: #{out_conv_forward.1} parent=5 // pred_region
        %s181 = ssub.s32 %s11, 1
        // Predicated region
        $region33: #{out_conv_forward.1} parent=31 // pred_check
          %p182 = pneg %p72
        $region34: #{out_conv_forward.1} parent=31 // pred_check_branch
          %184 = sbr.rel (%p182) target = $region36
        $region35: #{out_conv_forward.1} parent=31 // pred_region
          %185 = dma.done [#allocation3], 64
        $region36: #{out_conv_forward.1} parent=31 // pred_fallthru
          _
        // Predicated region
        $region37: #{out_conv_forward.1} parent=31 // pred_check
          %p186 = pneg %p93
        $region38: #{out_conv_forward.1} parent=31 // pred_check_branch
          %188 = sbr.rel (%p186) target = $region40
        $region39: #{out_conv_forward.1} parent=31 // pred_region
          %189 = dma.done [#allocation5], 16
        $region40: #{out_conv_forward.1} parent=31 // pred_fallthru
          _
        %190 = sfence
        %s191 = smul.u32 2, %s21
        %p192 = scmp.lt.s32.totalorder %s20, 1
        %s193 = scalar_select %p192, %s20, 1
        %p194 = scmp.lt.s32.totalorder %s191, 1
        %s195 = scalar_select %p194, %s191, 1
        %s196 = smul.addr %s193, 2
        %s197 = sadd.s32 %s195, %s196
        %s198 = smul.addr %s197, 4
        %s199 = scalar_lea.vmem %s0, %s198
        %p200 = pneg %p51
        %p201 = pneg %p48
        %p202 = pneg %p72
        %p203 = pneg %p69
        %p204 = pneg %p93
        %p205 = pneg %p90
        %p206 = pneg %p121
        %p207 = pneg %p118
        %s208 = smul.u32 2, %s21
        %p209 = scmp.lt.s32.totalorder %s20, 1
        %s210 = scalar_select %p209, %s20, 1
        %p211 = scmp.lt.s32.totalorder %s208, 1
        %s212 = scalar_select %p211, %s208, 1
        %s213 = smul.addr %s210, 2
        %s214 = sadd.s32 %s212, %s213
        %s215 = smul.addr %s214, 4
        %s216 = scalar_lea.vmem %s3, %s215
        %s217 = smul.u32 2, %s21
        %p218 = scmp.lt.s32.totalorder %s20, 1
        %s219 = scalar_select %p218, %s20, 1
        %p220 = scmp.lt.s32.totalorder %s217, 1
        %s221 = scalar_select %p220, %s217, 1
        %s222 = smul.addr %s219, 2
        %s223 = sadd.s32 %s221, %s222
        %s224 = smul.addr %s223, 4
        %s225 = scalar_lea.vmem %s0, %s224
        %s226 = smul.u32 2, %s21
        %s227 = smul.u32 2, %s21
        %p228 = scmp.lt.s32.totalorder %s20, 1
        %s229 = scalar_select %p228, %s20, 1
        %p230 = scmp.lt.s32.totalorder %s227, 1
        %s231 = scalar_select %p230, %s227, 1
        %s232 = smul.addr %s229, 2
        %s233 = sadd.s32 %s231, %s232
        %s234 = smul.addr %s233, 4
        %s235 = scalar_lea.vmem %s3, %s234
        %s236 = smul.u32 2, %s21
        %v237 = vld [vmem:[%s225] sm:$0xff]
        %s238 = sld [smem:[#allocation4]]
        %v239 = vstv %s238
        %s240 = sld [smem:[#allocation2]]
        %v241 = vstv %s240
        %v242 = vmul.f32 %v241, %v237
        %v243 = vadd.f32 %v239, %v242
        %s244 = sld [smem:[#allocation2 + $0x1]]
        %v245 = vstv %s244
        %v246 = vmul.f32 %v245, %v237
        %v248 = vrot.slane %v246, 5
        %v249 = vrot.slane %v248, 4
        %v251 = vadd.f32 %v243, %v249
        %s252 = sld [smem:[#allocation2 + $0x2]]
        %v253 = vstv %s252
        %v254 = vmul.f32 %v253, %v237
        %v256 = vrot.slane %v254, 6
        %v257 = vrot.slane %v256, 4
        %v259 = vadd.f32 %v251, %v257
        %s260 = sld [smem:[#allocation2 + $0x3]]
        %v261 = vstv %s260
        %v262 = vmul.f32 %v261, %v237
        %v264 = vrot.slane %v262, 7
        %v265 = vrot.slane %v264, 4
        %v267 = vadd.f32 %v259, %v265
        %s268 = sld [smem:[#allocation4 + $0x1]]
        %v269 = vstv %s268
        %s270 = sld [smem:[#allocation2 + $0x80]]
        %v271 = vstv %s270
        %v272 = vmul.f32 %v271, %v237
        %v273 = vadd.f32 %v269, %v272
        %s274 = sld [smem:[#allocation2 + $0x81]]
        %v275 = vstv %s274
        %v276 = vmul.f32 %v275, %v237
        %v278 = vrot.slane %v276, 5
        %v279 = vrot.slane %v278, 4
        %v281 = vadd.f32 %v273, %v279
        %s282 = sld [smem:[#allocation2 + $0x82]]
        %v283 = vstv %s282
        %v284 = vmul.f32 %v283, %v237
        %v286 = vrot.slane %v284, 6
        %v287 = vrot.slane %v286, 4
        %v289 = vadd.f32 %v281, %v287
        %s290 = sld [smem:[#allocation2 + $0x83]]
        %v291 = vstv %s290
        %v292 = vmul.f32 %v291, %v237
        %v294 = vrot.slane %v292, 7
        %v295 = vrot.slane %v294, 4
        %v297 = vadd.f32 %v289, %v295
        %s298 = sld [smem:[#allocation4 + $0x2]]
        %v299 = vstv %s298
        %s300 = sld [smem:[#allocation2 + $0x100]]
        %v301 = vstv %s300
        %v302 = vmul.f32 %v301, %v237
        %v303 = vadd.f32 %v299, %v302
        %s304 = sld [smem:[#allocation2 + $0x101]]
        %v305 = vstv %s304
        %v306 = vmul.f32 %v305, %v237
        %v308 = vrot.slane %v306, 5
        %v309 = vrot.slane %v308, 4
        %v311 = vadd.f32 %v303, %v309
        %s312 = sld [smem:[#allocation2 + $0x102]]
        %v313 = vstv %s312
        %v314 = vmul.f32 %v313, %v237
        %v316 = vrot.slane %v314, 6
        %v317 = vrot.slane %v316, 4
        %v319 = vadd.f32 %v311, %v317
        %s320 = sld [smem:[#allocation2 + $0x103]]
        %v321 = vstv %s320
        %v322 = vmul.f32 %v321, %v237
        %v324 = vrot.slane %v322, 7
        %v325 = vrot.slane %v324, 4
        %v327 = vadd.f32 %v319, %v325
        %v329 = vlaneseq
        %v330 = vshrl.u32 %v329, 7
        %v331 = vsub.s32 0, %v330
        %v332 = vrot.slane %v267, %v331
        %v333 = vlaneseq
        %v334 = vshrl.u32 %v333, 7
        %v335 = vsub.s32 4, %v334
        %v336 = vrot.slane %v267, %v335
        %v340 = vlaneseq
        %v341 = vshrl.u32 %v340, 7
        %v342 = vsub.s32 0, %v341
        %v343 = vrot.slane %v297, %v342
        %v344 = vlaneseq
        %v345 = vshrl.u32 %v344, 7
        %v346 = vsub.s32 4, %v345
        %v347 = vrot.slane %v297, %v346
        %v351 = vlaneseq
        %v352 = vshrl.u32 %v351, 7
        %v353 = vsub.s32 0, %v352
        %v354 = vrot.slane %v327, %v353
        %v355 = vlaneseq
        %v356 = vshrl.u32 %v355, 7
        %v357 = vsub.s32 4, %v356
        %v358 = vrot.slane %v327, %v357
        %vm361 = vcmask 1040384
        %v362 = vsel %vm361, %v332, %v343
        %v363 = vsel %vm361, %v336, %v347
        %vm364 = vcmask 1041408
        %v365 = vsel %vm364, %v362, %v354
        %v366 = vsel %vm364, %v363, %v358
        %v369 = vcombine.low %v365, %v366
        %371 = vst [vmem:[%s235] sm:$0x77] %v369
        %s372 = smul.u32 2, %s21
        %p373 = scmp.lt.s32.totalorder %s20, 1
        %s374 = scalar_select %p373, %s20, 1
        %p375 = scmp.lt.s32.totalorder %s372, 1
        %s376 = scalar_select %p375, %s372, 1
        %s377 = smul.addr %s374, 2
        %s378 = sadd.s32 %s376, %s377
        %s379 = smul.addr %s378, 4
        %s380 = scalar_lea.vmem %s3, %s379
        // Predicated region
        $region41: #{out_conv_forward.1} parent=31 // pred_check
          %p381 = pneg %p118
        $region42: #{out_conv_forward.1} parent=31 // pred_check_branch
          %383 = sbr.rel (%p381) target = $region44
        $region43: #{out_conv_forward.1} parent=31 // pred_region
          %s384 = smul.u32 2, %s21
        $region44: #{out_conv_forward.1} parent=31 // pred_fallthru
          _
      $region32: #{out_conv_forward.1} parent=5 // pred_fallthru
        _
      %p385 = scmp.le.s32.totalorder 2, %s11
      // Predicated region
      $region45: #{out_conv_forward.1} parent=5 // pred_check
        %p386 = pneg %p385
      $region46: #{out_conv_forward.1} parent=5 // pred_check_branch
        %388 = sbr.rel (%p386) target = $region48
      $region47: #{out_conv_forward.1} parent=5 // pred_region
        %s389 = ssub.s32 %s11, 2
        // Predicated region
        $region49: #{out_conv_forward.1} parent=47 // pred_check
          %p390 = pneg %p124
        $region50: #{out_conv_forward.1} parent=47 // pred_check_branch
          %392 = sbr.rel (%p390) target = $region52
        $region51: #{out_conv_forward.1} parent=47 // pred_region
          %s393 = smul.u32 2, %s23
          %p394 = scmp.lt.s32.totalorder %s22, 1
          %s395 = scalar_select %p394, %s22, 1
          %p396 = scmp.lt.s32.totalorder %s393, 1
          %s397 = scalar_select %p396, %s393, 1
          %s398 = smul.addr %s395, 2
          %s399 = sadd.s32 %s397, %s398
          %s400 = smul.addr %s399, 4
          %s401 = scalar_lea.vmem %s3, %s400
        $region52: #{out_conv_forward.1} parent=47 // pred_fallthru
          _
      $region48: #{out_conv_forward.1} parent=5 // pred_fallthru
        _
    $region6: #{out_conv_forward.1} parent=1 // loop_footer
      %s15 = sadd.s32 1, %s11
    $region7: #{out_conv_forward.1} parent=1 // loop_footer_branch
      %10 = sbr.rel target = $region3
    $region8: #{out_conv_forward.1} parent=1 // loop_exit
      _
    %402 = vsyncpa [#allocation3], 1
    %s403 = scalar_lea.sflag [#allocation3], 1
    %404 = vsyncpa %s403, 1
    %405 = vsyncpa [#allocation5], 1

</llo_original>
